<compile_context>
chip_gen: v6e
topology: v6e:2x2x1
jax: 0.10.0
libtpu: 0.0.40
codegen_flags: <defaults>
</compile_context>

<pallas_src>
import jax
import jax.numpy as jnp
from jax.experimental import pallas as pl
from jax.experimental.pallas import tpu as pltpu

STATE_SIZE = 6
ACTION_SIZE = 3
HIDDEN = 128
HEAD_OUT = ACTION_SIZE + 1   # fused head rows: [pi logits (3) | value (1)]
TB_MAX = 256                 # batch tile (lanes); 256 bounds padding & spill


def _round_up(n, m):
    return ((n + m - 1) // m) * m


def actor_critic_kernel(x_ref, w1_ref, b1_ref, w2_ref, b2_ref,
                        wh_ref, bh_ref, out_ref):
    # ---- Layer 1: Linear(6 -> 128) + ReLU, on the VPU, in f32 -------------
    # h1^T[j, b] = sum_k W1[j, k] * x^T[k, b] + b1[j]
    xT = x_ref[...]                       # (6, tb)  f32
    w1 = w1_ref[...]                      # (128, 6) f32
    acc = w1[:, 0:1] * xT[0:1, :]         # (128, tb) via lane/sublane bcast
    for k in range(1, STATE_SIZE):
        acc = acc + w1[:, k:k + 1] * xT[k:k + 1, :]
    h1 = jnp.maximum(acc + b1_ref[...], 0.0)              # (128, tb) f32

    # ---- Layer 2: Linear(128 -> 128) + ReLU, MXU bf16, f32 accumulation ---
    h2 = jnp.dot(w2_ref[...], h1.astype(jnp.bfloat16),
                 preferred_element_type=jnp.float32) + b2_ref[...]
    h2 = jnp.maximum(h2, 0.0)                              # (128, tb) f32

    # ---- Fused heads: one (4, 128) @ (128, tb) matmul, f32 ----------------
    head = jnp.dot(wh_ref[...], h2,
                   preferred_element_type=jnp.float32) + bh_ref[...]  # (4, tb)
    logits = head[:ACTION_SIZE, :]                         # (3, tb)
    value = head[ACTION_SIZE:, :]                          # (1, tb)

    # Numerically-stable softmax over the 3 actions (sublane axis), exact div.
    m = jnp.max(logits, axis=0, keepdims=True)
    e = jnp.exp(logits - m)
    pi = e / jnp.sum(e, axis=0, keepdims=True)

    # Two sublane stores into the lane-dense (4, tb) output block.
    out_ref[:ACTION_SIZE, :] = pi
    out_ref[ACTION_SIZE:, :] = value


def actor_critic_forward(x, params):
    """x: (batch, 6) f32. Returns (pi (batch, 3), v (batch, 1))."""
    (w1, b1, w2, b2, wpi, bpi, wv, bv) = params
    batch = x.shape[0]

    # Fuse the two heads; keep PyTorch's (out, in) weight layout.
    wh = jnp.concatenate([wpi, wv], axis=0)                 # (4, 128) f32
    bh = jnp.concatenate([bpi, bv], axis=0)[:, None]        # (4, 1)
    b1c = b1[:, None]                                       # (128, 1)
    b2c = b2[:, None]                                       # (128, 1)

    # Batch lives on the lane axis: tile must be a multiple of 128.
    tb = min(TB_MAX, _round_up(batch, 128))
    padded = _round_up(batch, tb)

    xT = x.astype(jnp.float32).T                            # (6, batch)
    if padded != batch:
        xT = jnp.pad(xT, ((0, 0), (0, padded - batch)))

    w2_bf = w2.astype(jnp.bfloat16)                         # MXU-native operand

    resident = lambda i: (0, 0)   # weights/biases: DMA'd once, VMEM-resident

    flops = 2 * padded * (STATE_SIZE * HIDDEN
                          + HIDDEN * HIDDEN
                          + HIDDEN * HEAD_OUT)
    bytes_accessed = (padded * (STATE_SIZE + HEAD_OUT) * 4
                      + (STATE_SIZE * HIDDEN + HIDDEN) * 4
                      + HIDDEN * HIDDEN * 2 + HIDDEN * 4
                      + HEAD_OUT * HIDDEN * 4 + HEAD_OUT * 4)

    out = pl.pallas_call(
        actor_critic_kernel,
        out_shape=jax.ShapeDtypeStruct((HEAD_OUT, padded), jnp.float32),
        grid=(padded // tb,),
        in_specs=[
            pl.BlockSpec((STATE_SIZE, tb), lambda i: (0, i)),   # x^T tile
            pl.BlockSpec((HIDDEN, STATE_SIZE), resident),       # W1 (128, 6)
            pl.BlockSpec((HIDDEN, 1), resident),                # b1
            pl.BlockSpec((HIDDEN, HIDDEN), resident),           # W2 (bf16)
            pl.BlockSpec((HIDDEN, 1), resident),                # b2
            pl.BlockSpec((HEAD_OUT, HIDDEN), resident),         # W_head (4,128)
            pl.BlockSpec((HEAD_OUT, 1), resident),              # b_head
        ],
        out_specs=pl.BlockSpec((HEAD_OUT, tb), lambda i: (0, i)),
        compiler_params=pltpu.CompilerParams(
            dimension_semantics=("parallel",)),                 # v7x megacore
        cost_estimate=pl.CostEstimate(
            flops=flops,
            transcendentals=padded * ACTION_SIZE,
            bytes_accessed=bytes_accessed),
    )(xT, w1, b1c, w2_bf, b2c, wh, bh)

    pi = out[:ACTION_SIZE, :batch].T                        # (batch, 3)
    v = out[ACTION_SIZE:, :batch].T                         # (batch, 1)
    return pi, v


def init_params(key):
    """Deterministic init mimicking torch.nn.Linear's U(-1/sqrt(fan_in), +).
    Weights kept in PyTorch (out_features, in_features) layout."""
    def linear(key, fan_in, fan_out):
        kw, kb = jax.random.split(key)
        bound = 1.0 / jnp.sqrt(fan_in)
        w = jax.random.uniform(kw, (fan_out, fan_in), jnp.float32, -bound, bound)
        b = jax.random.uniform(kb, (fan_out,), jnp.float32, -bound, bound)
        return w, b

    k1, k2, k3, k4 = jax.random.split(key, 4)
    w1, b1 = linear(k1, STATE_SIZE, HIDDEN)
    w2, b2 = linear(k2, HIDDEN, HIDDEN)
    wpi, bpi = linear(k3, HIDDEN, ACTION_SIZE)
    wv, bv = linear(k4, HIDDEN, 1)
    return (w1, b1, w2, b2, wpi, bpi, wv, bv)


def reference_forward_f32(x, params):
    """Pure f32 reference (matches the PyTorch module exactly)."""
    (w1, b1, w2, b2, wpi, bpi, wv, bv) = params
    h = jax.nn.relu(x @ w1.T + b1)
    h = jax.nn.relu(h @ w2.T + b2)
    return jax.nn.softmax(h @ wpi.T + bpi, axis=-1), h @ wv.T + bv


def reference_forward_mixed(x, params):
    """Mixed-precision reference matching the kernel (only layer 2 is bf16)."""
    (w1, b1, w2, b2, wpi, bpi, wv, bv) = params
    h1 = jnp.maximum(x @ w1.T + b1, 0.0)
    h2 = jnp.maximum(
        jnp.dot(h1.astype(jnp.bfloat16), w2.T.astype(jnp.bfloat16),
                preferred_element_type=jnp.float32) + b2, 0.0)
    return jax.nn.softmax(h2 @ wpi.T + bpi, axis=-1), h2 @ wv.T + bv


def _check(x, params):
    pi, v = actor_critic_forward(x, params)
    jax.block_until_ready((pi, v))
    assert pi.shape == (x.shape[0], ACTION_SIZE) and v.shape == (x.shape[0], 1)

    # Tight check against the matching mixed-precision reference.
    pi_m, v_m = reference_forward_mixed(x, params)
    assert jnp.allclose(pi, pi_m, atol=1e-3, rtol=1e-3)
    assert jnp.allclose(v, v_m, atol=1e-3, rtol=1e-3)

    # Check against the full-f32 PyTorch-equivalent reference (only the
    # 128x128 matmul uses bf16 operands, so the match is reasonably tight).
    pi_f, v_f = reference_forward_f32(x, params)
    assert jnp.allclose(pi, pi_f, atol=2e-2)
    assert jnp.allclose(v, v_f, atol=2e-2, rtol=2e-2)

    # Softmax rows sum to 1 (exact reciprocal -> f32 precision).
    assert jnp.allclose(jnp.sum(pi, axis=-1), 1.0, atol=1e-5)


if __name__ == "__main__":
    key = jax.random.PRNGKey(0)
    kx, kx2, kp = jax.random.split(key, 3)
    params = init_params(kp)

    # Small batch (single grid step; batch padded onto a 128-lane tile).
    x_small = jax.random.normal(kx, (8, STATE_SIZE), dtype=jnp.float32)
    _check(x_small, params)

    # Larger batch exercising multiple grid steps + lane padding (300 -> 512).
    x_multi = jax.random.normal(kx2, (300, STATE_SIZE), dtype=jnp.float32)
    _check(x_multi, params)

    print("KERNEL_OK")
</pallas_src>

<mosaic_0001>
module attributes {stable_mosaic.version = 11 : i64} {
  func.func @actor_critic_kernel(%arg0: i32, %arg1: memref<6x128xf32, #tpu.memory_space<vmem>>, %arg2: memref<128x6xf32, #tpu.memory_space<vmem>>, %arg3: memref<128x1xf32, #tpu.memory_space<vmem>>, %arg4: memref<128x128xbf16, #tpu.memory_space<vmem>>, %arg5: memref<128x1xf32, #tpu.memory_space<vmem>>, %arg6: memref<4x128xf32, #tpu.memory_space<vmem>>, %arg7: memref<4x1xf32, #tpu.memory_space<vmem>>, %arg8: memref<4x128xf32, #tpu.memory_space<vmem>>) attributes {dimension_semantics = [#tpu.dimension_semantics<parallel>], iteration_bounds = array<i64: 1>, scalar_prefetch = 0 : i64, scratch_operands = 0 : i64, tpu.core_type = #tpu.core_type<tc>, window_params = [{transform_indices = @transform_0, window_bounds = array<i64: 6, 128>}, {pipeline_mode = #tpu.pipeline_mode<synchronous>, transform_indices = @transform_1, window_bounds = array<i64: 128, 6>}, {pipeline_mode = #tpu.pipeline_mode<synchronous>, transform_indices = @transform_2, window_bounds = array<i64: 128, 1>}, {pipeline_mode = #tpu.pipeline_mode<synchronous>, transform_indices = @transform_3, window_bounds = array<i64: 128, 128>}, {pipeline_mode = #tpu.pipeline_mode<synchronous>, transform_indices = @transform_4, window_bounds = array<i64: 128, 1>}, {pipeline_mode = #tpu.pipeline_mode<synchronous>, transform_indices = @transform_5, window_bounds = array<i64: 4, 128>}, {pipeline_mode = #tpu.pipeline_mode<synchronous>, transform_indices = @transform_6, window_bounds = array<i64: 4, 1>}, {transform_indices = @transform_7, window_bounds = array<i64: 4, 128>}]} {
    %c0 = arith.constant 0 : index
    %c0_0 = arith.constant 0 : index
    %0 = vector.load %arg1[%c0, %c0_0] : memref<6x128xf32, #tpu.memory_space<vmem>>, vector<6x128xf32>
    %c0_1 = arith.constant 0 : index
    %c0_2 = arith.constant 0 : index
    %1 = vector.load %arg2[%c0_1, %c0_2] : memref<128x6xf32, #tpu.memory_space<vmem>>, vector<128x6xf32>
    %2 = vector.extract_strided_slice %1 {offsets = [0, 0], sizes = [128, 1], strides = [1, 1]} : vector<128x6xf32> to vector<128x1xf32>
    %3 = vector.extract_strided_slice %0 {offsets = [0, 0], sizes = [1, 128], strides = [1, 1]} : vector<6x128xf32> to vector<1x128xf32>
    %4 = vector.broadcast %2 : vector<128x1xf32> to vector<128x128xf32>
    %5 = vector.broadcast %3 : vector<1x128xf32> to vector<128x128xf32>
    %6 = arith.mulf %4, %5 : vector<128x128xf32>
    %7 = vector.extract_strided_slice %1 {offsets = [0, 1], sizes = [128, 1], strides = [1, 1]} : vector<128x6xf32> to vector<128x1xf32>
    %8 = vector.extract_strided_slice %0 {offsets = [1, 0], sizes = [1, 128], strides = [1, 1]} : vector<6x128xf32> to vector<1x128xf32>
    %9 = vector.broadcast %7 : vector<128x1xf32> to vector<128x128xf32>
    %10 = vector.broadcast %8 : vector<1x128xf32> to vector<128x128xf32>
    %11 = arith.mulf %9, %10 : vector<128x128xf32>
    %12 = arith.addf %6, %11 : vector<128x128xf32>
    %13 = vector.extract_strided_slice %1 {offsets = [0, 2], sizes = [128, 1], strides = [1, 1]} : vector<128x6xf32> to vector<128x1xf32>
    %14 = vector.extract_strided_slice %0 {offsets = [2, 0], sizes = [1, 128], strides = [1, 1]} : vector<6x128xf32> to vector<1x128xf32>
    %15 = vector.broadcast %13 : vector<128x1xf32> to vector<128x128xf32>
    %16 = vector.broadcast %14 : vector<1x128xf32> to vector<128x128xf32>
    %17 = arith.mulf %15, %16 : vector<128x128xf32>
    %18 = arith.addf %12, %17 : vector<128x128xf32>
    %19 = vector.extract_strided_slice %1 {offsets = [0, 3], sizes = [128, 1], strides = [1, 1]} : vector<128x6xf32> to vector<128x1xf32>
    %20 = vector.extract_strided_slice %0 {offsets = [3, 0], sizes = [1, 128], strides = [1, 1]} : vector<6x128xf32> to vector<1x128xf32>
    %21 = vector.broadcast %19 : vector<128x1xf32> to vector<128x128xf32>
    %22 = vector.broadcast %20 : vector<1x128xf32> to vector<128x128xf32>
    %23 = arith.mulf %21, %22 : vector<128x128xf32>
    %24 = arith.addf %18, %23 : vector<128x128xf32>
    %25 = vector.extract_strided_slice %1 {offsets = [0, 4], sizes = [128, 1], strides = [1, 1]} : vector<128x6xf32> to vector<128x1xf32>
    %26 = vector.extract_strided_slice %0 {offsets = [4, 0], sizes = [1, 128], strides = [1, 1]} : vector<6x128xf32> to vector<1x128xf32>
    %27 = vector.broadcast %25 : vector<128x1xf32> to vector<128x128xf32>
    %28 = vector.broadcast %26 : vector<1x128xf32> to vector<128x128xf32>
    %29 = arith.mulf %27, %28 : vector<128x128xf32>
    %30 = arith.addf %24, %29 : vector<128x128xf32>
    %31 = vector.extract_strided_slice %1 {offsets = [0, 5], sizes = [128, 1], strides = [1, 1]} : vector<128x6xf32> to vector<128x1xf32>
    %32 = vector.extract_strided_slice %0 {offsets = [5, 0], sizes = [1, 128], strides = [1, 1]} : vector<6x128xf32> to vector<1x128xf32>
    %33 = vector.broadcast %31 : vector<128x1xf32> to vector<128x128xf32>
    %34 = vector.broadcast %32 : vector<1x128xf32> to vector<128x128xf32>
    %35 = arith.mulf %33, %34 : vector<128x128xf32>
    %36 = arith.addf %30, %35 : vector<128x128xf32>
    %c0_3 = arith.constant 0 : index
    %c0_4 = arith.constant 0 : index
    %37 = vector.load %arg3[%c0_3, %c0_4] : memref<128x1xf32, #tpu.memory_space<vmem>>, vector<128x1xf32>
    %38 = vector.broadcast %37 : vector<128x1xf32> to vector<128x128xf32>
    %39 = arith.addf %36, %38 : vector<128x128xf32>
    %cst = arith.constant 0.000000e+00 : f32
    %40 = vector.broadcast %cst : f32 to vector<128x128xf32>
    %41 = arith.maximumf %39, %40 : vector<128x128xf32>
    %c0_5 = arith.constant 0 : index
    %c0_6 = arith.constant 0 : index
    %42 = vector.load %arg4[%c0_5, %c0_6] : memref<128x128xbf16, #tpu.memory_space<vmem>>, vector<128x128xbf16>
    %43 = arith.truncf %41 : vector<128x128xf32> to vector<128x128xbf16>
    %cst_7 = arith.constant dense<0.000000e+00> : vector<128x128xf32>
    %44 = tpu.matmul %42, %43, %cst_7 {dimension_numbers = #tpu.dot_dimension_numbers<[1], [0], [0], [1], [0, 0, 1, 1], [], []>} : vector<128x128xbf16>, vector<128x128xbf16>, vector<128x128xf32> -> vector<128x128xf32>
    %c0_8 = arith.constant 0 : index
    %c0_9 = arith.constant 0 : index
    %45 = vector.load %arg5[%c0_8, %c0_9] : memref<128x1xf32, #tpu.memory_space<vmem>>, vector<128x1xf32>
    %46 = vector.broadcast %45 : vector<128x1xf32> to vector<128x128xf32>
    %47 = arith.addf %44, %46 : vector<128x128xf32>
    %cst_10 = arith.constant 0.000000e+00 : f32
    %48 = vector.broadcast %cst_10 : f32 to vector<128x128xf32>
    %49 = arith.maximumf %47, %48 : vector<128x128xf32>
    %c0_11 = arith.constant 0 : index
    %c0_12 = arith.constant 0 : index
    %50 = vector.load %arg6[%c0_11, %c0_12] : memref<4x128xf32, #tpu.memory_space<vmem>>, vector<4x128xf32>
    %cst_13 = arith.constant dense<0.000000e+00> : vector<4x128xf32>
    %51 = tpu.matmul %50, %49, %cst_13 {dimension_numbers = #tpu.dot_dimension_numbers<[1], [0], [0], [1], [0, 0, 1, 1], [], []>} : vector<4x128xf32>, vector<128x128xf32>, vector<4x128xf32> -> vector<4x128xf32>
    %c0_14 = arith.constant 0 : index
    %c0_15 = arith.constant 0 : index
    %52 = vector.load %arg7[%c0_14, %c0_15] : memref<4x1xf32, #tpu.memory_space<vmem>>, vector<4x1xf32>
    %53 = vector.broadcast %52 : vector<4x1xf32> to vector<4x128xf32>
    %54 = arith.addf %51, %53 : vector<4x128xf32>
    %55 = vector.extract_strided_slice %54 {offsets = [0, 0], sizes = [3, 128], strides = [1, 1]} : vector<4x128xf32> to vector<3x128xf32>
    %56 = vector.extract_strided_slice %54 {offsets = [3, 0], sizes = [1, 128], strides = [1, 1]} : vector<4x128xf32> to vector<1x128xf32>
    %cst_16 = arith.constant dense<0xFF800000> : vector<128xf32>
    %57 = vector.multi_reduction <maximumf>, %55, %cst_16 [0] : vector<3x128xf32> to vector<128xf32>
    %58 = vector.shape_cast %57 : vector<128xf32> to vector<1x128xf32>
    %59 = vector.broadcast %58 : vector<1x128xf32> to vector<3x128xf32>
    %60 = arith.subf %55, %59 : vector<3x128xf32>
    %61 = math.exp %60 : vector<3x128xf32>
    %cst_17 = arith.constant dense<0.000000e+00> : vector<128xf32>
    %62 = vector.multi_reduction <add>, %61, %cst_17 [0] : vector<3x128xf32> to vector<128xf32>
    %63 = vector.shape_cast %62 : vector<128xf32> to vector<1x128xf32>
    %64 = vector.broadcast %63 : vector<1x128xf32> to vector<3x128xf32>
    %65 = arith.divf %61, %64 : vector<3x128xf32>
    %c0_18 = arith.constant 0 : index
    %c0_19 = arith.constant 0 : index
    %66 = vector.load %arg8[%c0_18, %c0_19] : memref<4x128xf32, #tpu.memory_space<vmem>>, vector<3x128xf32>
    tpu.vector_store %arg8[%c0_18, %c0_19], %65 {strides = array<i32>} : memref<4x128xf32, #tpu.memory_space<vmem>>, vector<3x128xf32>,
    %c3 = arith.constant 3 : index
    %c0_20 = arith.constant 0 : index
    %67 = vector.load %arg8[%c3, %c0_20] : memref<4x128xf32, #tpu.memory_space<vmem>>, vector<1x128xf32>
    tpu.vector_store %arg8[%c3, %c0_20], %56 {strides = array<i32>} : memref<4x128xf32, #tpu.memory_space<vmem>>, vector<1x128xf32>,
    return
  }
  func.func @transform_0(%arg0: i32) -> (i32, i32) {
    %c0_i32 = arith.constant 0 : i32
    %c0_i32_0 = arith.constant 0 : i32
    return %c0_i32, %arg0 : i32, i32
  }
  func.func @transform_1(%arg0: i32) -> (i32, i32) {
    %c0_i32 = arith.constant 0 : i32
    %c0_i32_0 = arith.constant 0 : i32
    %c0_i32_1 = arith.constant 0 : i32
    return %c0_i32, %c0_i32_0 : i32, i32
  }
  func.func @transform_2(%arg0: i32) -> (i32, i32) {
    %c0_i32 = arith.constant 0 : i32
    %c0_i32_0 = arith.constant 0 : i32
    %c0_i32_1 = arith.constant 0 : i32
    return %c0_i32, %c0_i32_0 : i32, i32
  }
  func.func @transform_3(%arg0: i32) -> (i32, i32) {
    %c0_i32 = arith.constant 0 : i32
    %c0_i32_0 = arith.constant 0 : i32
    %c0_i32_1 = arith.constant 0 : i32
    return %c0_i32, %c0_i32_0 : i32, i32
  }
  func.func @transform_4(%arg0: i32) -> (i32, i32) {
    %c0_i32 = arith.constant 0 : i32
    %c0_i32_0 = arith.constant 0 : i32
    %c0_i32_1 = arith.constant 0 : i32
    return %c0_i32, %c0_i32_0 : i32, i32
  }
  func.func @transform_5(%arg0: i32) -> (i32, i32) {
    %c0_i32 = arith.constant 0 : i32
    %c0_i32_0 = arith.constant 0 : i32
    %c0_i32_1 = arith.constant 0 : i32
    return %c0_i32, %c0_i32_0 : i32, i32
  }
  func.func @transform_6(%arg0: i32) -> (i32, i32) {
    %c0_i32 = arith.constant 0 : i32
    %c0_i32_0 = arith.constant 0 : i32
    %c0_i32_1 = arith.constant 0 : i32
    return %c0_i32, %c0_i32_0 : i32, i32
  }
  func.func @transform_7(%arg0: i32) -> (i32, i32) {
    %c0_i32 = arith.constant 0 : i32
    %c0_i32_0 = arith.constant 0 : i32
    return %c0_i32, %arg0 : i32, i32
  }
}

</mosaic_0001>

<llo_original>
// kernel: tpu_custom_call.1
$region0: #{tpu_custom_call.1}
  #allocation0 [shape = 'u32[]', space=smem, size = 0x4, offset = 0x4, fixed_abs, tag = 'smem constant byte address 0x4 - core index']
  #allocation1 [shape = 'u32[144,128]{1,0:T(1,128)}', space=vmem, size = 0x12000, scoped, tag = 'internal scratch']
  %s0 = inlined_call_operand.vmem [shape: f32[6,128], index: 0, kind: input, shape index: {}]
  %s1 = inlined_call_operand.vmem [shape: f32[128,6], index: 1, kind: input, shape index: {}]
  %s2 = inlined_call_operand.vmem [shape: f32[128,1], index: 2, kind: input, shape index: {}]
  %s3 = inlined_call_operand.vmem [shape: bf16[128,128], index: 3, kind: input, shape index: {}]
  %s4 = inlined_call_operand.vmem [shape: f32[128,1], index: 4, kind: input, shape index: {}]
  %s5 = inlined_call_operand.vmem [shape: f32[4,128], index: 5, kind: input, shape index: {}]
  %s6 = inlined_call_operand.vmem [shape: f32[4,1], index: 6, kind: input, shape index: {}]
  %s7 = inlined_call_operand.hbm [shape: f32[4,128], index: 7, kind: output, shape index: {}]
  %s8 = sld [smem:[#allocation0]]
  $region38: #{tpu_custom_call.1} parent=0
    _
  %s10 = ssub.s32 1, %s8
  %s11 = scalar_select 0, %s10, %s8
  $region1: #{tpu_custom_call.1} parent=0
    #allocation2 [shape = 'u8[2048]{0}', space=vmem, size = 0x800, scoped, tag = 'output window, operand 0, single buffered']
    #allocation3 [shape = 's32[1]{0}', space=sflag, size = 0x4, scoped, tag = 'scoped memory for tpu_custom_call.1']
    %12 = vsyncpa [#allocation3], 0
    // Predicated region
    $region2: #{tpu_custom_call.1} parent=1 // pred_check
      _
    $region3: #{tpu_custom_call.1} parent=1 // pred_check_branch
      %14 = sbr.rel (0) target = $region5
    $region4: #{tpu_custom_call.1} parent=1 // pred_region
      _
    $region5: #{tpu_custom_call.1} parent=1 // pred_fallthru
      _
    // Predicated region
    $region6: #{tpu_custom_call.1} parent=1 // pred_check
      _
    $region7: #{tpu_custom_call.1} parent=1 // pred_check_branch
      %16 = sbr.rel (0) target = $region9
    $region8: #{tpu_custom_call.1} parent=1 // pred_region
      _
    $region9: #{tpu_custom_call.1} parent=1 // pred_fallthru
      _
    // Predicated region
    $region10: #{tpu_custom_call.1} parent=1 // pred_check
      _
    $region11: #{tpu_custom_call.1} parent=1 // pred_check_branch
      %18 = sbr.rel (0) target = $region13
    $region12: #{tpu_custom_call.1} parent=1 // pred_region
      _
    $region13: #{tpu_custom_call.1} parent=1 // pred_fallthru
      _
    // Predicated region
    $region14: #{tpu_custom_call.1} parent=1 // pred_check
      _
    $region15: #{tpu_custom_call.1} parent=1 // pred_check_branch
      %20 = sbr.rel (0) target = $region17
    $region16: #{tpu_custom_call.1} parent=1 // pred_region
      _
    $region17: #{tpu_custom_call.1} parent=1 // pred_fallthru
      _
    // Predicated region
    $region18: #{tpu_custom_call.1} parent=1 // pred_check
      _
    $region19: #{tpu_custom_call.1} parent=1 // pred_check_branch
      %22 = sbr.rel (0) target = $region21
    $region20: #{tpu_custom_call.1} parent=1 // pred_region
      _
    $region21: #{tpu_custom_call.1} parent=1 // pred_fallthru
      _
    // Predicated region
    $region22: #{tpu_custom_call.1} parent=1 // pred_check
      _
    $region23: #{tpu_custom_call.1} parent=1 // pred_check_branch
      %24 = sbr.rel (0) target = $region25
    $region24: #{tpu_custom_call.1} parent=1 // pred_region
      _
    $region25: #{tpu_custom_call.1} parent=1 // pred_fallthru
      _
    // Predicated region
    $region26: #{tpu_custom_call.1} parent=1 // pred_check
      _
    $region27: #{tpu_custom_call.1} parent=1 // pred_check_branch
      %26 = sbr.rel (0) target = $region29
    $region28: #{tpu_custom_call.1} parent=1 // pred_region
      _
    $region29: #{tpu_custom_call.1} parent=1 // pred_fallthru
      _
    %v28 = vld [vmem:[%s0] sm:$0x3f]
    %v29 = vld [vmem:[%s1] sm:$0xff]
    %v30 = vld [vmem:[%s1 + $0x8] sm:$0xff]
    %v31 = vld [vmem:[%s1 + $0x10] sm:$0xff]
    %v32 = vld [vmem:[%s1 + $0x18] sm:$0xff]
    %v33 = vld [vmem:[%s1 + $0x20] sm:$0xff]
    %v34 = vld [vmem:[%s1 + $0x28] sm:$0xff]
    %v35 = vld [vmem:[%s1 + $0x30] sm:$0xff]
    %v36 = vld [vmem:[%s1 + $0x38] sm:$0xff]
    %v37 = vld [vmem:[%s1 + $0x40] sm:$0xff]
    %v38 = vld [vmem:[%s1 + $0x48] sm:$0xff]
    %v39 = vld [vmem:[%s1 + $0x50] sm:$0xff]
    %v40 = vld [vmem:[%s1 + $0x58] sm:$0xff]
    %v41 = vld [vmem:[%s1 + $0x60] sm:$0xff]
    %v42 = vld [vmem:[%s1 + $0x68] sm:$0xff]
    %v43 = vld [vmem:[%s1 + $0x70] sm:$0xff]
    %v44 = vld [vmem:[%s1 + $0x78] sm:$0xff]
    %46 = vset.pattern.permute.xlu0 0
    %47 = vperm.xlu0 %46, %v29
    %v48 = vpop.permute.xlu0 %47
    %51 = vset.pattern.permute.xlu0 0
    %52 = vperm.xlu0 %51, %v30
    %v53 = vpop.permute.xlu0 %52
    %56 = vset.pattern.permute.xlu0 0
    %57 = vperm.xlu0 %56, %v31
    %v58 = vpop.permute.xlu0 %57
    %61 = vset.pattern.permute.xlu0 0
    %62 = vperm.xlu0 %61, %v32
    %v63 = vpop.permute.xlu0 %62
    %66 = vset.pattern.permute.xlu0 0
    %67 = vperm.xlu0 %66, %v33
    %v68 = vpop.permute.xlu0 %67
    %71 = vset.pattern.permute.xlu0 0
    %72 = vperm.xlu0 %71, %v34
    %v73 = vpop.permute.xlu0 %72
    %76 = vset.pattern.permute.xlu0 0
    %77 = vperm.xlu0 %76, %v35
    %v78 = vpop.permute.xlu0 %77
    %81 = vset.pattern.permute.xlu0 0
    %82 = vperm.xlu0 %81, %v36
    %v83 = vpop.permute.xlu0 %82
    %86 = vset.pattern.permute.xlu0 0
    %87 = vperm.xlu0 %86, %v37
    %v88 = vpop.permute.xlu0 %87
    %91 = vset.pattern.permute.xlu0 0
    %92 = vperm.xlu0 %91, %v38
    %v93 = vpop.permute.xlu0 %92
    %96 = vset.pattern.permute.xlu0 0
    %97 = vperm.xlu0 %96, %v39
    %v98 = vpop.permute.xlu0 %97
    %101 = vset.pattern.permute.xlu0 0
    %102 = vperm.xlu0 %101, %v40
    %v103 = vpop.permute.xlu0 %102
    %106 = vset.pattern.permute.xlu0 0
    %107 = vperm.xlu0 %106, %v41
    %v108 = vpop.permute.xlu0 %107
    %111 = vset.pattern.permute.xlu0 0
    %112 = vperm.xlu0 %111, %v42
    %v113 = vpop.permute.xlu0 %112
    %116 = vset.pattern.permute.xlu0 0
    %117 = vperm.xlu0 %116, %v43
    %v118 = vpop.permute.xlu0 %117
    %121 = vset.pattern.permute.xlu0 0
    %122 = vperm.xlu0 %121, %v44
    %v123 = vpop.permute.xlu0 %122
    %v125 = vlaneseq
    %v126 = vshrl.u32 %v125, 7
    %v127 = vsub.s32 0, %v126
    %v128 = vrot.slane %v28, %v127
    %v129 = vmul.f32 %v48, %v128
    %v130 = vmul.f32 %v53, %v128
    %v131 = vmul.f32 %v58, %v128
    %v132 = vmul.f32 %v63, %v128
    %v133 = vmul.f32 %v68, %v128
    %v134 = vmul.f32 %v73, %v128
    %v135 = vmul.f32 %v78, %v128
    %v136 = vmul.f32 %v83, %v128
    %v137 = vmul.f32 %v88, %v128
    %v138 = vmul.f32 %v93, %v128
    %v139 = vmul.f32 %v98, %v128
    %v140 = vmul.f32 %v103, %v128
    %v141 = vmul.f32 %v108, %v128
    %v142 = vmul.f32 %v113, %v128
    %v143 = vmul.f32 %v118, %v128
    %v144 = vmul.f32 %v123, %v128
    %145 = vset.pattern.permute.xlu0 1
    %146 = vperm.xlu0 %145, %v29
    %v147 = vpop.permute.xlu0 %146
    %149 = vset.pattern.permute.xlu0 1
    %150 = vperm.xlu0 %149, %v30
    %v151 = vpop.permute.xlu0 %150
    %153 = vset.pattern.permute.xlu0 1
    %154 = vperm.xlu0 %153, %v31
    %v155 = vpop.permute.xlu0 %154
    %157 = vset.pattern.permute.xlu0 1
    %158 = vperm.xlu0 %157, %v32
    %v159 = vpop.permute.xlu0 %158
    %161 = vset.pattern.permute.xlu0 1
    %162 = vperm.xlu0 %161, %v33
    %v163 = vpop.permute.xlu0 %162
    %165 = vset.pattern.permute.xlu0 1
    %166 = vperm.xlu0 %165, %v34
    %v167 = vpop.permute.xlu0 %166
    %169 = vset.pattern.permute.xlu0 1
    %170 = vperm.xlu0 %169, %v35
    %v171 = vpop.permute.xlu0 %170
    %173 = vset.pattern.permute.xlu0 1
    %174 = vperm.xlu0 %173, %v36
    %v175 = vpop.permute.xlu0 %174
    %177 = vset.pattern.permute.xlu0 1
    %178 = vperm.xlu0 %177, %v37
    %v179 = vpop.permute.xlu0 %178
    %181 = vset.pattern.permute.xlu0 1
    %182 = vperm.xlu0 %181, %v38
    %v183 = vpop.permute.xlu0 %182
    %185 = vset.pattern.permute.xlu0 1
    %186 = vperm.xlu0 %185, %v39
    %v187 = vpop.permute.xlu0 %186
    %189 = vset.pattern.permute.xlu0 1
    %190 = vperm.xlu0 %189, %v40
    %v191 = vpop.permute.xlu0 %190
    %193 = vset.pattern.permute.xlu0 1
    %194 = vperm.xlu0 %193, %v41
    %v195 = vpop.permute.xlu0 %194
    %197 = vset.pattern.permute.xlu0 1
    %198 = vperm.xlu0 %197, %v42
    %v199 = vpop.permute.xlu0 %198
    %201 = vset.pattern.permute.xlu0 1
    %202 = vperm.xlu0 %201, %v43
    %v203 = vpop.permute.xlu0 %202
    %205 = vset.pattern.permute.xlu0 1
    %206 = vperm.xlu0 %205, %v44
    %v207 = vpop.permute.xlu0 %206
    %v209 = vlaneseq
    %v210 = vshrl.u32 %v209, 7
    %v211 = vsub.s32 1, %v210
    %v212 = vrot.slane %v28, %v211
    %v213 = vmul.f32 %v147, %v212
    %v214 = vmul.f32 %v151, %v212
    %v215 = vmul.f32 %v155, %v212
    %v216 = vmul.f32 %v159, %v212
    %v217 = vmul.f32 %v163, %v212
    %v218 = vmul.f32 %v167, %v212
    %v219 = vmul.f32 %v171, %v212
    %v220 = vmul.f32 %v175, %v212
    %v221 = vmul.f32 %v179, %v212
    %v222 = vmul.f32 %v183, %v212
    %v223 = vmul.f32 %v187, %v212
    %v224 = vmul.f32 %v191, %v212
    %v225 = vmul.f32 %v195, %v212
    %v226 = vmul.f32 %v199, %v212
    %v227 = vmul.f32 %v203, %v212
    %v228 = vmul.f32 %v207, %v212
    %v229 = vadd.f32 %v129, %v213
    %v230 = vadd.f32 %v130, %v214
    %v231 = vadd.f32 %v131, %v215
    %v232 = vadd.f32 %v132, %v216
    %v233 = vadd.f32 %v133, %v217
    %v234 = vadd.f32 %v134, %v218
    %v235 = vadd.f32 %v135, %v219
    %v236 = vadd.f32 %v136, %v220
    %v237 = vadd.f32 %v137, %v221
    %v238 = vadd.f32 %v138, %v222
    %v239 = vadd.f32 %v139, %v223
    %v240 = vadd.f32 %v140, %v224
    %v241 = vadd.f32 %v141, %v225
    %v242 = vadd.f32 %v142, %v226
    %v243 = vadd.f32 %v143, %v227
    %v244 = vadd.f32 %v144, %v228
    %245 = vset.pattern.permute.xlu0 2
    %246 = vperm.xlu0 %245, %v29
    %v247 = vpop.permute.xlu0 %246
    %249 = vset.pattern.permute.xlu0 2
    %250 = vperm.xlu0 %249, %v30
    %v251 = vpop.permute.xlu0 %250
    %253 = vset.pattern.permute.xlu0 2
    %254 = vperm.xlu0 %253, %v31
    %v255 = vpop.permute.xlu0 %254
    %257 = vset.pattern.permute.xlu0 2
    %258 = vperm.xlu0 %257, %v32
    %v259 = vpop.permute.xlu0 %258
    %261 = vset.pattern.permute.xlu0 2
    %262 = vperm.xlu0 %261, %v33
    %v263 = vpop.permute.xlu0 %262
    %265 = vset.pattern.permute.xlu0 2
    %266 = vperm.xlu0 %265, %v34
    %v267 = vpop.permute.xlu0 %266
    %269 = vset.pattern.permute.xlu0 2
    %270 = vperm.xlu0 %269, %v35
    %v271 = vpop.permute.xlu0 %270
    %273 = vset.pattern.permute.xlu0 2
    %274 = vperm.xlu0 %273, %v36
    %v275 = vpop.permute.xlu0 %274
    %277 = vset.pattern.permute.xlu0 2
    %278 = vperm.xlu0 %277, %v37
    %v279 = vpop.permute.xlu0 %278
    %281 = vset.pattern.permute.xlu0 2
    %282 = vperm.xlu0 %281, %v38
    %v283 = vpop.permute.xlu0 %282
    %285 = vset.pattern.permute.xlu0 2
    %286 = vperm.xlu0 %285, %v39
    %v287 = vpop.permute.xlu0 %286
    %289 = vset.pattern.permute.xlu0 2
    %290 = vperm.xlu0 %289, %v40
    %v291 = vpop.permute.xlu0 %290
    %293 = vset.pattern.permute.xlu0 2
    %294 = vperm.xlu0 %293, %v41
    %v295 = vpop.permute.xlu0 %294
    %297 = vset.pattern.permute.xlu0 2
    %298 = vperm.xlu0 %297, %v42
    %v299 = vpop.permute.xlu0 %298
    %301 = vset.pattern.permute.xlu0 2
    %302 = vperm.xlu0 %301, %v43
    %v303 = vpop.permute.xlu0 %302
    %305 = vset.pattern.permute.xlu0 2
    %306 = vperm.xlu0 %305, %v44
    %v307 = vpop.permute.xlu0 %306
    %v309 = vlaneseq
    %v310 = vshrl.u32 %v309, 7
    %v311 = vsub.s32 2, %v310
    %v312 = vrot.slane %v28, %v311
    %v313 = vmul.f32 %v247, %v312
    %v314 = vmul.f32 %v251, %v312
    %v315 = vmul.f32 %v255, %v312
    %v316 = vmul.f32 %v259, %v312
    %v317 = vmul.f32 %v263, %v312
    %v318 = vmul.f32 %v267, %v312
    %v319 = vmul.f32 %v271, %v312
    %v320 = vmul.f32 %v275, %v312
    %v321 = vmul.f32 %v279, %v312
    %v322 = vmul.f32 %v283, %v312
    %v323 = vmul.f32 %v287, %v312
    %v324 = vmul.f32 %v291, %v312
    %v325 = vmul.f32 %v295, %v312
    %v326 = vmul.f32 %v299, %v312
    %v327 = vmul.f32 %v303, %v312
    %v328 = vmul.f32 %v307, %v312
    %v329 = vadd.f32 %v229, %v313
    %v330 = vadd.f32 %v230, %v314
    %v331 = vadd.f32 %v231, %v315
    %v332 = vadd.f32 %v232, %v316
    %v333 = vadd.f32 %v233, %v317
    %v334 = vadd.f32 %v234, %v318
    %v335 = vadd.f32 %v235, %v319
    %v336 = vadd.f32 %v236, %v320
    %v337 = vadd.f32 %v237, %v321
    %v338 = vadd.f32 %v238, %v322
    %v339 = vadd.f32 %v239, %v323
    %v340 = vadd.f32 %v240, %v324
    %v341 = vadd.f32 %v241, %v325
    %v342 = vadd.f32 %v242, %v326
    %v343 = vadd.f32 %v243, %v327
    %v344 = vadd.f32 %v244, %v328
    %345 = vset.pattern.permute.xlu0 3
    %346 = vperm.xlu0 %345, %v29
    %v347 = vpop.permute.xlu0 %346
    %349 = vset.pattern.permute.xlu0 3
    %350 = vperm.xlu0 %349, %v30
    %v351 = vpop.permute.xlu0 %350
    %353 = vset.pattern.permute.xlu0 3
    %354 = vperm.xlu0 %353, %v31
    %v355 = vpop.permute.xlu0 %354
    %357 = vset.pattern.permute.xlu0 3
    %358 = vperm.xlu0 %357, %v32
    %v359 = vpop.permute.xlu0 %358
    %361 = vset.pattern.permute.xlu0 3
    %362 = vperm.xlu0 %361, %v33
    %v363 = vpop.permute.xlu0 %362
    %365 = vset.pattern.permute.xlu0 3
    %366 = vperm.xlu0 %365, %v34
    %v367 = vpop.permute.xlu0 %366
    %369 = vset.pattern.permute.xlu0 3
    %370 = vperm.xlu0 %369, %v35
    %v371 = vpop.permute.xlu0 %370
    %373 = vset.pattern.permute.xlu0 3
    %374 = vperm.xlu0 %373, %v36
    %v375 = vpop.permute.xlu0 %374
    %377 = vset.pattern.permute.xlu0 3
    %378 = vperm.xlu0 %377, %v37
    %v379 = vpop.permute.xlu0 %378
    %381 = vset.pattern.permute.xlu0 3
    %382 = vperm.xlu0 %381, %v38
    %v383 = vpop.permute.xlu0 %382
    %385 = vset.pattern.permute.xlu0 3
    %386 = vperm.xlu0 %385, %v39
    %v387 = vpop.permute.xlu0 %386
    %389 = vset.pattern.permute.xlu0 3
    %390 = vperm.xlu0 %389, %v40
    %v391 = vpop.permute.xlu0 %390
    %393 = vset.pattern.permute.xlu0 3
    %394 = vperm.xlu0 %393, %v41
    %v395 = vpop.permute.xlu0 %394
    %397 = vset.pattern.permute.xlu0 3
    %398 = vperm.xlu0 %397, %v42
    %v399 = vpop.permute.xlu0 %398
    %401 = vset.pattern.permute.xlu0 3
    %402 = vperm.xlu0 %401, %v43
    %v403 = vpop.permute.xlu0 %402
    %405 = vset.pattern.permute.xlu0 3
    %406 = vperm.xlu0 %405, %v44
    %v407 = vpop.permute.xlu0 %406
    %v409 = vlaneseq
    %v410 = vshrl.u32 %v409, 7
    %v411 = vsub.s32 3, %v410
    %v412 = vrot.slane %v28, %v411
    %v413 = vmul.f32 %v347, %v412
    %v414 = vmul.f32 %v351, %v412
    %v415 = vmul.f32 %v355, %v412
    %v416 = vmul.f32 %v359, %v412
    %v417 = vmul.f32 %v363, %v412
    %v418 = vmul.f32 %v367, %v412
    %v419 = vmul.f32 %v371, %v412
    %v420 = vmul.f32 %v375, %v412
    %v421 = vmul.f32 %v379, %v412
    %v422 = vmul.f32 %v383, %v412
    %v423 = vmul.f32 %v387, %v412
    %v424 = vmul.f32 %v391, %v412
    %v425 = vmul.f32 %v395, %v412
    %v426 = vmul.f32 %v399, %v412
    %v427 = vmul.f32 %v403, %v412
    %v428 = vmul.f32 %v407, %v412
    %v429 = vadd.f32 %v329, %v413
    %v430 = vadd.f32 %v330, %v414
    %v431 = vadd.f32 %v331, %v415
    %v432 = vadd.f32 %v332, %v416
    %v433 = vadd.f32 %v333, %v417
    %v434 = vadd.f32 %v334, %v418
    %v435 = vadd.f32 %v335, %v419
    %v436 = vadd.f32 %v336, %v420
    %v437 = vadd.f32 %v337, %v421
    %v438 = vadd.f32 %v338, %v422
    %v439 = vadd.f32 %v339, %v423
    %v440 = vadd.f32 %v340, %v424
    %v441 = vadd.f32 %v341, %v425
    %v442 = vadd.f32 %v342, %v426
    %v443 = vadd.f32 %v343, %v427
    %v444 = vadd.f32 %v344, %v428
    %445 = vset.pattern.permute.xlu0 4
    %446 = vperm.xlu0 %445, %v29
    %v447 = vpop.permute.xlu0 %446
    %449 = vset.pattern.permute.xlu0 4
    %450 = vperm.xlu0 %449, %v30
    %v451 = vpop.permute.xlu0 %450
    %453 = vset.pattern.permute.xlu0 4
    %454 = vperm.xlu0 %453, %v31
    %v455 = vpop.permute.xlu0 %454
    %457 = vset.pattern.permute.xlu0 4
    %458 = vperm.xlu0 %457, %v32
    %v459 = vpop.permute.xlu0 %458
    %461 = vset.pattern.permute.xlu0 4
    %462 = vperm.xlu0 %461, %v33
    %v463 = vpop.permute.xlu0 %462
    %465 = vset.pattern.permute.xlu0 4
    %466 = vperm.xlu0 %465, %v34
    %v467 = vpop.permute.xlu0 %466
    %469 = vset.pattern.permute.xlu0 4
    %470 = vperm.xlu0 %469, %v35
    %v471 = vpop.permute.xlu0 %470
    %473 = vset.pattern.permute.xlu0 4
    %474 = vperm.xlu0 %473, %v36
    %v475 = vpop.permute.xlu0 %474
    %477 = vset.pattern.permute.xlu0 4
    %478 = vperm.xlu0 %477, %v37
    %v479 = vpop.permute.xlu0 %478
    %481 = vset.pattern.permute.xlu0 4
    %482 = vperm.xlu0 %481, %v38
    %v483 = vpop.permute.xlu0 %482
    %485 = vset.pattern.permute.xlu0 4
    %486 = vperm.xlu0 %485, %v39
    %v487 = vpop.permute.xlu0 %486
    %489 = vset.pattern.permute.xlu0 4
    %490 = vperm.xlu0 %489, %v40
    %v491 = vpop.permute.xlu0 %490
    %493 = vset.pattern.permute.xlu0 4
    %494 = vperm.xlu0 %493, %v41
    %v495 = vpop.permute.xlu0 %494
    %497 = vset.pattern.permute.xlu0 4
    %498 = vperm.xlu0 %497, %v42
    %v499 = vpop.permute.xlu0 %498
    %501 = vset.pattern.permute.xlu0 4
    %502 = vperm.xlu0 %501, %v43
    %v503 = vpop.permute.xlu0 %502
    %505 = vset.pattern.permute.xlu0 4
    %506 = vperm.xlu0 %505, %v44
    %v507 = vpop.permute.xlu0 %506
    %v509 = vlaneseq
    %v510 = vshrl.u32 %v509, 7
    %v511 = vsub.s32 4, %v510
    %v512 = vrot.slane %v28, %v511
    %v513 = vmul.f32 %v447, %v512
    %v514 = vmul.f32 %v451, %v512
    %v515 = vmul.f32 %v455, %v512
    %v516 = vmul.f32 %v459, %v512
    %v517 = vmul.f32 %v463, %v512
    %v518 = vmul.f32 %v467, %v512
    %v519 = vmul.f32 %v471, %v512
    %v520 = vmul.f32 %v475, %v512
    %v521 = vmul.f32 %v479, %v512
    %v522 = vmul.f32 %v483, %v512
    %v523 = vmul.f32 %v487, %v512
    %v524 = vmul.f32 %v491, %v512
    %v525 = vmul.f32 %v495, %v512
    %v526 = vmul.f32 %v499, %v512
    %v527 = vmul.f32 %v503, %v512
    %v528 = vmul.f32 %v507, %v512
    %v529 = vadd.f32 %v429, %v513
    %v530 = vadd.f32 %v430, %v514
    %v531 = vadd.f32 %v431, %v515
    %v532 = vadd.f32 %v432, %v516
    %v533 = vadd.f32 %v433, %v517
    %v534 = vadd.f32 %v434, %v518
    %v535 = vadd.f32 %v435, %v519
    %v536 = vadd.f32 %v436, %v520
    %v537 = vadd.f32 %v437, %v521
    %v538 = vadd.f32 %v438, %v522
    %v539 = vadd.f32 %v439, %v523
    %v540 = vadd.f32 %v440, %v524
    %v541 = vadd.f32 %v441, %v525
    %v542 = vadd.f32 %v442, %v526
    %v543 = vadd.f32 %v443, %v527
    %v544 = vadd.f32 %v444, %v528
    %545 = vset.pattern.permute.xlu0 5
    %546 = vperm.xlu0 %545, %v29
    %v547 = vpop.permute.xlu0 %546
    %549 = vset.pattern.permute.xlu0 5
    %550 = vperm.xlu0 %549, %v30
    %v551 = vpop.permute.xlu0 %550
    %553 = vset.pattern.permute.xlu0 5
    %554 = vperm.xlu0 %553, %v31
    %v555 = vpop.permute.xlu0 %554
    %557 = vset.pattern.permute.xlu0 5
    %558 = vperm.xlu0 %557, %v32
    %v559 = vpop.permute.xlu0 %558
    %561 = vset.pattern.permute.xlu0 5
    %562 = vperm.xlu0 %561, %v33
    %v563 = vpop.permute.xlu0 %562
    %565 = vset.pattern.permute.xlu0 5
    %566 = vperm.xlu0 %565, %v34
    %v567 = vpop.permute.xlu0 %566
    %569 = vset.pattern.permute.xlu0 5
    %570 = vperm.xlu0 %569, %v35
    %v571 = vpop.permute.xlu0 %570
    %573 = vset.pattern.permute.xlu0 5
    %574 = vperm.xlu0 %573, %v36
    %v575 = vpop.permute.xlu0 %574
    %577 = vset.pattern.permute.xlu0 5
    %578 = vperm.xlu0 %577, %v37
    %v579 = vpop.permute.xlu0 %578
    %581 = vset.pattern.permute.xlu0 5
    %582 = vperm.xlu0 %581, %v38
    %v583 = vpop.permute.xlu0 %582
    %585 = vset.pattern.permute.xlu0 5
    %586 = vperm.xlu0 %585, %v39
    %v587 = vpop.permute.xlu0 %586
    %589 = vset.pattern.permute.xlu0 5
    %590 = vperm.xlu0 %589, %v40
    %v591 = vpop.permute.xlu0 %590
    %593 = vset.pattern.permute.xlu0 5
    %594 = vperm.xlu0 %593, %v41
    %v595 = vpop.permute.xlu0 %594
    %597 = vset.pattern.permute.xlu0 5
    %598 = vperm.xlu0 %597, %v42
    %v599 = vpop.permute.xlu0 %598
    %601 = vset.pattern.permute.xlu0 5
    %602 = vperm.xlu0 %601, %v43
    %v603 = vpop.permute.xlu0 %602
    %605 = vset.pattern.permute.xlu0 5
    %606 = vperm.xlu0 %605, %v44
    %v607 = vpop.permute.xlu0 %606
    %v609 = vlaneseq
    %v610 = vshrl.u32 %v609, 7
    %v611 = vsub.s32 5, %v610
    %v612 = vrot.slane %v28, %v611
    %v613 = vmul.f32 %v547, %v612
    %v614 = vmul.f32 %v551, %v612
    %v615 = vmul.f32 %v555, %v612
    %v616 = vmul.f32 %v559, %v612
    %v617 = vmul.f32 %v563, %v612
    %v618 = vmul.f32 %v567, %v612
    %v619 = vmul.f32 %v571, %v612
    %v620 = vmul.f32 %v575, %v612
    %v621 = vmul.f32 %v579, %v612
    %v622 = vmul.f32 %v583, %v612
    %v623 = vmul.f32 %v587, %v612
    %v624 = vmul.f32 %v591, %v612
    %v625 = vmul.f32 %v595, %v612
    %v626 = vmul.f32 %v599, %v612
    %v627 = vmul.f32 %v603, %v612
    %v628 = vmul.f32 %v607, %v612
    %v629 = vadd.f32 %v529, %v613
    %v630 = vadd.f32 %v530, %v614
    %v631 = vadd.f32 %v531, %v615
    %v632 = vadd.f32 %v532, %v616
    %v633 = vadd.f32 %v533, %v617
    %v634 = vadd.f32 %v534, %v618
    %v635 = vadd.f32 %v535, %v619
    %v636 = vadd.f32 %v536, %v620
    %v637 = vadd.f32 %v537, %v621
    %v638 = vadd.f32 %v538, %v622
    %v639 = vadd.f32 %v539, %v623
    %v640 = vadd.f32 %v540, %v624
    %v641 = vadd.f32 %v541, %v625
    %v642 = vadd.f32 %v542, %v626
    %v643 = vadd.f32 %v543, %v627
    %v644 = vadd.f32 %v544, %v628
    %v645 = vld [vmem:[%s2] sm:$0xff]
    %v646 = vld [vmem:[%s2 + $0x8] sm:$0xff]
    %v647 = vld [vmem:[%s2 + $0x10] sm:$0xff]
    %v648 = vld [vmem:[%s2 + $0x18] sm:$0xff]
    %v649 = vld [vmem:[%s2 + $0x20] sm:$0xff]
    %v650 = vld [vmem:[%s2 + $0x28] sm:$0xff]
    %v651 = vld [vmem:[%s2 + $0x30] sm:$0xff]
    %v652 = vld [vmem:[%s2 + $0x38] sm:$0xff]
    %v653 = vld [vmem:[%s2 + $0x40] sm:$0xff]
    %v654 = vld [vmem:[%s2 + $0x48] sm:$0xff]
    %v655 = vld [vmem:[%s2 + $0x50] sm:$0xff]
    %v656 = vld [vmem:[%s2 + $0x58] sm:$0xff]
    %v657 = vld [vmem:[%s2 + $0x60] sm:$0xff]
    %v658 = vld [vmem:[%s2 + $0x68] sm:$0xff]
    %v659 = vld [vmem:[%s2 + $0x70] sm:$0xff]
    %v660 = vld [vmem:[%s2 + $0x78] sm:$0xff]
    %662 = vset.pattern.permute.xlu0 0
    %663 = vperm.xlu0 %662, %v645
    %v664 = vpop.permute.xlu0 %663
    %667 = vset.pattern.permute.xlu0 0
    %668 = vperm.xlu0 %667, %v646
    %v669 = vpop.permute.xlu0 %668
    %672 = vset.pattern.permute.xlu0 0
    %673 = vperm.xlu0 %672, %v647
    %v674 = vpop.permute.xlu0 %673
    %677 = vset.pattern.permute.xlu0 0
    %678 = vperm.xlu0 %677, %v648
    %v679 = vpop.permute.xlu0 %678
    %682 = vset.pattern.permute.xlu0 0
    %683 = vperm.xlu0 %682, %v649
    %v684 = vpop.permute.xlu0 %683
    %687 = vset.pattern.permute.xlu0 0
    %688 = vperm.xlu0 %687, %v650
    %v689 = vpop.permute.xlu0 %688
    %692 = vset.pattern.permute.xlu0 0
    %693 = vperm.xlu0 %692, %v651
    %v694 = vpop.permute.xlu0 %693
    %697 = vset.pattern.permute.xlu0 0
    %698 = vperm.xlu0 %697, %v652
    %v699 = vpop.permute.xlu0 %698
    %702 = vset.pattern.permute.xlu0 0
    %703 = vperm.xlu0 %702, %v653
    %v704 = vpop.permute.xlu0 %703
    %707 = vset.pattern.permute.xlu0 0
    %708 = vperm.xlu0 %707, %v654
    %v709 = vpop.permute.xlu0 %708
    %712 = vset.pattern.permute.xlu0 0
    %713 = vperm.xlu0 %712, %v655
    %v714 = vpop.permute.xlu0 %713
    %717 = vset.pattern.permute.xlu0 0
    %718 = vperm.xlu0 %717, %v656
    %v719 = vpop.permute.xlu0 %718
    %722 = vset.pattern.permute.xlu0 0
    %723 = vperm.xlu0 %722, %v657
    %v724 = vpop.permute.xlu0 %723
    %727 = vset.pattern.permute.xlu0 0
    %728 = vperm.xlu0 %727, %v658
    %v729 = vpop.permute.xlu0 %728
    %732 = vset.pattern.permute.xlu0 0
    %733 = vperm.xlu0 %732, %v659
    %v734 = vpop.permute.xlu0 %733
    %737 = vset.pattern.permute.xlu0 0
    %738 = vperm.xlu0 %737, %v660
    %v739 = vpop.permute.xlu0 %738
    %v741 = vadd.f32 %v629, %v664
    %v742 = vadd.f32 %v630, %v669
    %v743 = vadd.f32 %v631, %v674
    %v744 = vadd.f32 %v632, %v679
    %v745 = vadd.f32 %v633, %v684
    %v746 = vadd.f32 %v634, %v689
    %v747 = vadd.f32 %v635, %v694
    %v748 = vadd.f32 %v636, %v699
    %v749 = vadd.f32 %v637, %v704
    %v750 = vadd.f32 %v638, %v709
    %v751 = vadd.f32 %v639, %v714
    %v752 = vadd.f32 %v640, %v719
    %v753 = vadd.f32 %v641, %v724
    %v754 = vadd.f32 %v642, %v729
    %v755 = vadd.f32 %v643, %v734
    %v756 = vadd.f32 %v644, %v739
    %v757 = vmax.f32 %v741, 0.0
    %v758 = vmax.f32 %v742, 0.0
    %v759 = vmax.f32 %v743, 0.0
    %v760 = vmax.f32 %v744, 0.0
    %v761 = vmax.f32 %v745, 0.0
    %v762 = vmax.f32 %v746, 0.0
    %v763 = vmax.f32 %v747, 0.0
    %v764 = vmax.f32 %v748, 0.0
    %v765 = vmax.f32 %v749, 0.0
    %v766 = vmax.f32 %v750, 0.0
    %v767 = vmax.f32 %v751, 0.0
    %v768 = vmax.f32 %v752, 0.0
    %v769 = vmax.f32 %v753, 0.0
    %v770 = vmax.f32 %v754, 0.0
    %v771 = vmax.f32 %v755, 0.0
    %v772 = vmax.f32 %v756, 0.0
    %v773 = vld [vmem:[%s3] sm:$0xf]
    %v774 = vld [vmem:[%s3 + $0x4] sm:$0xf]
    %v775 = vld [vmem:[%s3 + $0x8] sm:$0xf]
    %v776 = vld [vmem:[%s3 + $0xc] sm:$0xf]
    %v777 = vld [vmem:[%s3 + $0x10] sm:$0xf]
    %v778 = vld [vmem:[%s3 + $0x14] sm:$0xf]
    %v779 = vld [vmem:[%s3 + $0x18] sm:$0xf]
    %v780 = vld [vmem:[%s3 + $0x1c] sm:$0xf]
    %v781 = vld [vmem:[%s3 + $0x20] sm:$0xf]
    %v782 = vld [vmem:[%s3 + $0x24] sm:$0xf]
    %v783 = vld [vmem:[%s3 + $0x28] sm:$0xf]
    %v784 = vld [vmem:[%s3 + $0x2c] sm:$0xf]
    %v785 = vld [vmem:[%s3 + $0x30] sm:$0xf]
    %v786 = vld [vmem:[%s3 + $0x34] sm:$0xf]
    %v787 = vld [vmem:[%s3 + $0x38] sm:$0xf]
    %v788 = vld [vmem:[%s3 + $0x3c] sm:$0xf]
    %v789 = vpack.c.bf16 %v758, %v757
    %v790 = vpack.c.bf16 %v760, %v759
    %v791 = vpack.c.bf16 %v762, %v761
    %v792 = vpack.c.bf16 %v764, %v763
    %v793 = vpack.c.bf16 %v766, %v765
    %v794 = vpack.c.bf16 %v768, %v767
    %v795 = vpack.c.bf16 %v770, %v769
    %v796 = vpack.c.bf16 %v772, %v771
    %v797 = vld [vmem:[%s4] sm:$0xff]
    %v798 = vld [vmem:[%s4 + $0x8] sm:$0xff]
    %v799 = vld [vmem:[%s4 + $0x10] sm:$0xff]
    %v800 = vld [vmem:[%s4 + $0x18] sm:$0xff]
    %v801 = vld [vmem:[%s4 + $0x20] sm:$0xff]
    %v802 = vld [vmem:[%s4 + $0x28] sm:$0xff]
    %v803 = vld [vmem:[%s4 + $0x30] sm:$0xff]
    %v804 = vld [vmem:[%s4 + $0x38] sm:$0xff]
    %v805 = vld [vmem:[%s4 + $0x40] sm:$0xff]
    %v806 = vld [vmem:[%s4 + $0x48] sm:$0xff]
    %v807 = vld [vmem:[%s4 + $0x50] sm:$0xff]
    %v808 = vld [vmem:[%s4 + $0x58] sm:$0xff]
    %v809 = vld [vmem:[%s4 + $0x60] sm:$0xff]
    %v810 = vld [vmem:[%s4 + $0x68] sm:$0xff]
    %v811 = vld [vmem:[%s4 + $0x70] sm:$0xff]
    %v812 = vld [vmem:[%s4 + $0x78] sm:$0xff]
    %814 = vset.pattern.permute.xlu0 0
    %815 = vperm.xlu0 %814, %v797
    %v816 = vpop.permute.xlu0 %815
    %819 = vset.pattern.permute.xlu0 0
    %820 = vperm.xlu0 %819, %v798
    %v821 = vpop.permute.xlu0 %820
    %824 = vset.pattern.permute.xlu0 0
    %825 = vperm.xlu0 %824, %v799
    %v826 = vpop.permute.xlu0 %825
    %829 = vset.pattern.permute.xlu0 0
    %830 = vperm.xlu0 %829, %v800
    %v831 = vpop.permute.xlu0 %830
    %834 = vset.pattern.permute.xlu0 0
    %835 = vperm.xlu0 %834, %v801
    %v836 = vpop.permute.xlu0 %835
    %839 = vset.pattern.permute.xlu0 0
    %840 = vperm.xlu0 %839, %v802
    %v841 = vpop.permute.xlu0 %840
    %844 = vset.pattern.permute.xlu0 0
    %845 = vperm.xlu0 %844, %v803
    %v846 = vpop.permute.xlu0 %845
    %849 = vset.pattern.permute.xlu0 0
    %850 = vperm.xlu0 %849, %v804
    %v851 = vpop.permute.xlu0 %850
    %854 = vset.pattern.permute.xlu0 0
    %855 = vperm.xlu0 %854, %v805
    %v856 = vpop.permute.xlu0 %855
    %859 = vset.pattern.permute.xlu0 0
    %860 = vperm.xlu0 %859, %v806
    %v861 = vpop.permute.xlu0 %860
    %864 = vset.pattern.permute.xlu0 0
    %865 = vperm.xlu0 %864, %v807
    %v866 = vpop.permute.xlu0 %865
    %869 = vset.pattern.permute.xlu0 0
    %870 = vperm.xlu0 %869, %v808
    %v871 = vpop.permute.xlu0 %870
    %874 = vset.pattern.permute.xlu0 0
    %875 = vperm.xlu0 %874, %v809
    %v876 = vpop.permute.xlu0 %875
    %879 = vset.pattern.permute.xlu0 0
    %880 = vperm.xlu0 %879, %v810
    %v881 = vpop.permute.xlu0 %880
    %884 = vset.pattern.permute.xlu0 0
    %885 = vperm.xlu0 %884, %v811
    %v886 = vpop.permute.xlu0 %885
    %889 = vset.pattern.permute.xlu0 0
    %890 = vperm.xlu0 %889, %v812
    %v891 = vpop.permute.xlu0 %890
    %v909 = vunpack.c.l.b16 %v773
    %v910 = vunpack.c.l.b16 %v774
    %v911 = vunpack.c.l.b16 %v775
    %v912 = vunpack.c.l.b16 %v776
    %v913 = vunpack.c.l.b16 %v777
    %v914 = vunpack.c.l.b16 %v778
    %v915 = vunpack.c.l.b16 %v779
    %v916 = vunpack.c.l.b16 %v780
    %v917 = vunpack.c.l.b16 %v781
    %v918 = vunpack.c.l.b16 %v782
    %v919 = vunpack.c.l.b16 %v783
    %v920 = vunpack.c.l.b16 %v784
    %v921 = vunpack.c.l.b16 %v785
    %v922 = vunpack.c.l.b16 %v786
    %v923 = vunpack.c.l.b16 %v787
    %v924 = vunpack.c.l.b16 %v788
    %v925 = vpack.c.b16 %v910, %v909
    %v926 = vpack.c.b16 %v912, %v911
    %v927 = vpack.c.b16 %v914, %v913
    %v928 = vpack.c.b16 %v916, %v915
    %v929 = vpack.c.b16 %v918, %v917
    %v930 = vpack.c.b16 %v920, %v919
    %v931 = vpack.c.b16 %v922, %v921
    %v932 = vpack.c.b16 %v924, %v923
    %941 = vmatprep.subr.bf16.mxu0 0
    %942 = vmatpush1.bf16.msra.mxu0 %v796
    %943 = vmatprep.subr.bf16.mxu0 0
    %944 = vmatpush1.bf16.msra.mxu0 %v795
    %945 = vmatprep.subr.bf16.mxu0 0
    %946 = vmatpush1.bf16.msra.mxu0 %v794
    %947 = vmatprep.subr.bf16.mxu0 0
    %948 = vmatpush1.bf16.msra.mxu0 %v793
    %949 = vmatprep.subr.bf16.mxu0 0
    %950 = vmatpush1.bf16.msra.mxu0 %v792
    %951 = vmatprep.subr.bf16.mxu0 0
    %952 = vmatpush1.bf16.msra.mxu0 %v791
    %953 = vmatprep.subr.bf16.mxu0 0
    %954 = vmatpush1.bf16.msra.mxu0 %v790
    %955 = vmatprep.subr.bf16.mxu0 0
    %956 = vmatpush1.bf16.msra.mxu0 %v789
    %957 = vmatprep.subr.bf16.mxu0 0
    %958 = vmatpush2.bf16.msra.mxu0 0
    %959 = vmatprep.subr.bf16.mxu0 0
    %960 = vmatpush2.bf16.msra.mxu0 0
    %961 = vmatprep.subr.bf16.mxu0 0
    %962 = vmatpush2.bf16.msra.mxu0 0
    %963 = vmatprep.subr.bf16.mxu0 0
    %964 = vmatpush2.bf16.msra.mxu0 0
    %965 = vmatprep.subr.bf16.mxu0 0
    %966 = vmatpush2.bf16.msra.mxu0 0
    %967 = vmatprep.subr.bf16.mxu0 0
    %968 = vmatpush2.bf16.msra.mxu0 0
    %969 = vmatprep.subr.bf16.mxu0 0
    %970 = vmatpush2.bf16.msra.mxu0 0
    %971 = vmatprep.subr.bf16.mxu0 0
    %972 = vmatpush2.bf16.msra.mxu0 0
    %973 = vmatprep.mubr.bf16.mxu0 0
    %974 = vmatmul.mubr.bf16.gmra.mxu0 %v925
    %v975 = vpop.f32.mrf.mxu0
    %v976 = vadd.f32 %v816, %v975
    %v977 = vpop.f32.mrf.mxu0
    %v978 = vpop.f32.mrf.mxu0
    %v979 = vadd.f32 %v821, %v978
    %v980 = vpop.f32.mrf.mxu0
    %981 = vmatprep.mubr.bf16.mxu0 0
    %982 = vmatmul.mubr.bf16.gmra.mxu0 %v926
    %v983 = vpop.f32.mrf.mxu0
    %v984 = vadd.f32 %v826, %v983
    %v985 = vpop.f32.mrf.mxu0
    %v986 = vpop.f32.mrf.mxu0
    %v987 = vadd.f32 %v831, %v986
    %v988 = vpop.f32.mrf.mxu0
    %989 = vmatprep.mubr.bf16.mxu0 0
    %990 = vmatmul.mubr.bf16.gmra.mxu0 %v927
    %v991 = vpop.f32.mrf.mxu0
    %v992 = vadd.f32 %v836, %v991
    %v993 = vpop.f32.mrf.mxu0
    %v994 = vpop.f32.mrf.mxu0
    %v995 = vadd.f32 %v841, %v994
    %v996 = vpop.f32.mrf.mxu0
    %997 = vmatprep.mubr.bf16.mxu0 0
    %998 = vmatmul.mubr.bf16.gmra.mxu0 %v928
    %v999 = vpop.f32.mrf.mxu0
    %v1000 = vadd.f32 %v846, %v999
    %v1001 = vpop.f32.mrf.mxu0
    %v1002 = vpop.f32.mrf.mxu0
    %v1003 = vadd.f32 %v851, %v1002
    %v1004 = vpop.f32.mrf.mxu0
    %1005 = vmatprep.mubr.bf16.mxu0 0
    %1006 = vmatmul.mubr.bf16.gmra.mxu0 %v929
    %v1007 = vpop.f32.mrf.mxu0
    %v1008 = vadd.f32 %v856, %v1007
    %v1009 = vpop.f32.mrf.mxu0
    %v1010 = vpop.f32.mrf.mxu0
    %v1011 = vadd.f32 %v861, %v1010
    %v1012 = vpop.f32.mrf.mxu0
    %1013 = vmatprep.mubr.bf16.mxu0 0
    %1014 = vmatmul.mubr.bf16.gmra.mxu0 %v930
    %v1015 = vpop.f32.mrf.mxu0
    %v1016 = vadd.f32 %v866, %v1015
    %v1017 = vpop.f32.mrf.mxu0
    %v1018 = vpop.f32.mrf.mxu0
    %v1019 = vadd.f32 %v871, %v1018
    %v1020 = vpop.f32.mrf.mxu0
    %1021 = vmatprep.mubr.bf16.mxu0 0
    %1022 = vmatmul.mubr.bf16.gmra.mxu0 %v931
    %v1023 = vpop.f32.mrf.mxu0
    %v1024 = vadd.f32 %v876, %v1023
    %v1025 = vpop.f32.mrf.mxu0
    %v1026 = vpop.f32.mrf.mxu0
    %v1027 = vadd.f32 %v881, %v1026
    %v1028 = vpop.f32.mrf.mxu0
    %1029 = vmatprep.mubr.bf16.mxu0 0
    %1030 = vmatmul.mubr.bf16.gmra.mxu0 %v932
    %v1031 = vpop.f32.mrf.mxu0
    %v1032 = vadd.f32 %v886, %v1031
    %v1033 = vpop.f32.mrf.mxu0
    %v1034 = vpop.f32.mrf.mxu0
    %v1035 = vadd.f32 %v891, %v1034
    %v1036 = vpop.f32.mrf.mxu0
    %1037 = vdwg.mxu0
    %v1038 = vmax.f32 %v976, 0.0
    %v1039 = vmax.f32 %v979, 0.0
    %v1040 = vmax.f32 %v984, 0.0
    %v1041 = vmax.f32 %v987, 0.0
    %v1042 = vmax.f32 %v992, 0.0
    %v1043 = vmax.f32 %v995, 0.0
    %v1044 = vmax.f32 %v1000, 0.0
    %v1045 = vmax.f32 %v1003, 0.0
    %v1046 = vmax.f32 %v1008, 0.0
    %v1047 = vmax.f32 %v1011, 0.0
    %v1048 = vmax.f32 %v1016, 0.0
    %v1049 = vmax.f32 %v1019, 0.0
    %v1050 = vmax.f32 %v1024, 0.0
    %v1051 = vmax.f32 %v1027, 0.0
    %v1052 = vmax.f32 %v1032, 0.0
    %v1053 = vmax.f32 %v1035, 0.0
    %v1054 = vld [vmem:[%s5] sm:$0xf]
    %v1055 = vld [vmem:[%s6] sm:$0xf]
    %1057 = vset.pattern.permute.xlu0 0
    %1058 = vperm.xlu0 %1057, %v1055
    %v1059 = vpop.permute.xlu0 %1058
    %1061 = vmatprep.subr.mxu0 0.0
    %1062 = vmatpush1.msra.mxu0 %v1053
    %1063 = vmatprep.subr.mxu0 0.0
    %1064 = vmatpush1.msra.mxu0 %v1052
    %1065 = vmatprep.subr.mxu0 0.0
    %1066 = vmatpush1.msra.mxu0 %v1051
    %1067 = vmatprep.subr.mxu0 0.0
    %1068 = vmatpush1.msra.mxu0 %v1050
    %1069 = vmatprep.subr.mxu0 0.0
    %1070 = vmatpush1.msra.mxu0 %v1049
    %1071 = vmatprep.subr.mxu0 0.0
    %1072 = vmatpush1.msra.mxu0 %v1048
    %1073 = vmatprep.subr.mxu0 0.0
    %1074 = vmatpush1.msra.mxu0 %v1047
    %1075 = vmatprep.subr.mxu0 0.0
    %1076 = vmatpush1.msra.mxu0 %v1046
    %1077 = vmatprep.subr.mxu0 0.0
    %1078 = vmatpush1.msra.mxu0 %v1045
    %1079 = vmatprep.subr.mxu0 0.0
    %1080 = vmatpush1.msra.mxu0 %v1044
    %1081 = vmatprep.subr.mxu0 0.0
    %1082 = vmatpush1.msra.mxu0 %v1043
    %1083 = vmatprep.subr.mxu0 0.0
    %1084 = vmatpush1.msra.mxu0 %v1042
    %1085 = vmatprep.subr.mxu0 0.0
    %1086 = vmatpush1.msra.mxu0 %v1041
    %1087 = vmatprep.subr.mxu0 0.0
    %1088 = vmatpush1.msra.mxu0 %v1040
    %1089 = vmatprep.subr.mxu0 0.0
    %1090 = vmatpush1.msra.mxu0 %v1039
    %1091 = vmatprep.subr.mxu0 0.0
    %1092 = vmatpush1.msra.mxu0 %v1038
    %1093 = vmatprep.subr.mxu0 0.0
    %1094 = vmatpush2.msra.mxu0 0.0
    %1095 = vmatprep.subr.mxu0 0.0
    %1096 = vmatpush2.msra.mxu0 0.0
    %1097 = vmatprep.subr.mxu0 0.0
    %1098 = vmatpush2.msra.mxu0 0.0
    %1099 = vmatprep.subr.mxu0 0.0
    %1100 = vmatpush2.msra.mxu0 0.0
    %1101 = vmatprep.subr.mxu0 0.0
    %1102 = vmatpush2.msra.mxu0 0.0
    %1103 = vmatprep.subr.mxu0 0.0
    %1104 = vmatpush2.msra.mxu0 0.0
    %1105 = vmatprep.subr.mxu0 0.0
    %1106 = vmatpush2.msra.mxu0 0.0
    %1107 = vmatprep.subr.mxu0 0.0
    %1108 = vmatpush2.msra.mxu0 0.0
    %1109 = vmatprep.subr.mxu0 0.0
    %1110 = vmatpush2.msra.mxu0 0.0
    %1111 = vmatprep.subr.mxu0 0.0
    %1112 = vmatpush2.msra.mxu0 0.0
    %1113 = vmatprep.subr.mxu0 0.0
    %1114 = vmatpush2.msra.mxu0 0.0
    %1115 = vmatprep.subr.mxu0 0.0
    %1116 = vmatpush2.msra.mxu0 0.0
    %1117 = vmatprep.subr.mxu0 0.0
    %1118 = vmatpush2.msra.mxu0 0.0
    %1119 = vmatprep.subr.mxu0 0.0
    %1120 = vmatpush2.msra.mxu0 0.0
    %1121 = vmatprep.subr.mxu0 0.0
    %1122 = vmatpush2.msra.mxu0 0.0
    %1123 = vmatprep.subr.mxu0 0.0
    %1124 = vmatpush2.msra.mxu0 0.0
    %1125 = vmatprep.mubr.f32.mxu0 0.0
    %1126 = vmatmul.mubr.f32.gmra.mxu0 %v1054
    %v1127 = vpop.f32.mrf.mxu0
    %v1128 = vadd.f32 %v1059, %v1127
    %v1129 = vpop.f32.mrf.mxu0
    %1130 = vdwg.mxu0
    %vm1131 = vcmask 1042432
    %v1132 = vsel %vm1131, %v1128, -inf
    %v1133 = vrot.slane %v1132, 4
    %v1134 = vmax.f32 %v1132, %v1133
    %v1135 = vrot.slane %v1134, 2
    %v1136 = vmax.f32 %v1134, %v1135
    %v1137 = vrot.slane %v1136, 1
    %v1138 = vmax.f32 %v1136, %v1137
    %v1139 = vsub.f32 %v1128, %v1138
    %v1140 = vmul.f32 %v1139, 1.442695
    %v1141 = vpow.pop %v1140
    %v1142 = vsel %vm1131, %v1141, 0.0
    %v1143 = vrot.slane %v1142, 4
    %v1144 = vadd.f32 %v1142, %v1143
    %v1145 = vrot.slane %v1144, 2
    %v1146 = vadd.f32 %v1144, %v1145
    %v1147 = vrot.slane %v1146, 1
    %v1148 = vadd.f32 %v1146, %v1147
    %v1149 = vrcp.pop %v1148
    %v1150 = vmul.f32 %v1141, %v1149
    %1151 = vst [vmem:[#allocation2] sm:$0x7] %v1150
    %1152 = vst [vmem:[#allocation2] sm:$0x8] %v1128
    // Predicated region
    $region30: #{tpu_custom_call.1} parent=1 // pred_check
      _
    $region31: #{tpu_custom_call.1} parent=1 // pred_check_branch
      %1154 = sbr.rel (0) target = $region33
    $region32: #{tpu_custom_call.1} parent=1 // pred_region
      %s1156 = ssub.s32 64, 64
      %1157 = vsyncadd [#allocation3], %s1156
      %s1159 = sshll.u32 [#allocation2], 4
      %s1160 = int_to_ptr.vmem [resolvable:$true] %s1159
      %1162 = dma.vmem_to_hbm [thread:$0]  %s1160, 64, %s7, [#allocation3]
    $region33: #{tpu_custom_call.1} parent=1 // pred_fallthru
      _
    // Predicated region
    $region34: #{tpu_custom_call.1} parent=1 // pred_check
      _
    $region35: #{tpu_custom_call.1} parent=1 // pred_check_branch
      %1164 = sbr.rel (0) target = $region37
    $region36: #{tpu_custom_call.1} parent=1 // pred_region
      %1165 = dma.done [#allocation3], 64
    $region37: #{tpu_custom_call.1} parent=1 // pred_fallthru
      _
    %1166 = vsyncpa [#allocation3], 1

</llo_original>
